<compile_context>
chip_gen: v7x
topology: tpu7x:2x2x1
jax: 0.10.0
libtpu: 0.0.40
codegen_flags: <defaults>
</compile_context>

<pallas_src>
import math
import functools

import jax
import jax.numpy as jnp
from jax import lax
from jax.experimental import pallas as pl
from jax.experimental.pallas import tpu as pltpu

LANES = 128
SUBLANES = 8
MAX_BLOCK_ROWS = 8192   # (8192, 128) f32 tile = 4 MiB per input per grid step
CHUNK_ROWS = 128        # fused inner sub-tile (64 KiB f32 per input per chunk)
VMEM_LIMIT_BYTES = 32 * 1024 * 1024


def _make_denorm(normalization_method, max_pixel):
    if normalization_method == 'log':
        scale = math.log(max_pixel + 1.0)
        return lambda x: jnp.exp(x * scale) - 1.0
    elif normalization_method == 'anscombe':
        s = math.sqrt(max_pixel + 3.0 / 8.0)
        return lambda x: (s * x) ** 2 - 3.0 / 8.0
    elif normalization_method == 'linear':
        return lambda x: x * max_pixel
    else:
        raise ValueError(f'Unknown normalization method: {normalization_method}')


def _log_likelihood(pred, targ, denorm, epsilon):
    pred_counts = jnp.maximum(denorm(pred), epsilon)
    targ_counts = jnp.maximum(denorm(targ), 0.0)
    return targ_counts * jnp.log(pred_counts) - pred_counts


def _poisson_ll_block_kernel(pred_ref, targ_ref, out_ref, *,
                             denorm, epsilon, block_rows, last_rows,
                             num_blocks, chunk_rows):
    """Writes the (8,128) per-(sublane,lane) partial sum of this block."""

    def chunk_ll_sum(start, crows):
        # Load a (crows, 128) sub-tile, do the elementwise chain, and fold it
        # into (8, 128): reshape along vreg boundaries -> pure VPU vreg adds.
        p = pred_ref[pl.ds(start, crows), :].astype(jnp.float32)
        t = targ_ref[pl.ds(start, crows), :].astype(jnp.float32)
        ll = _log_likelihood(p, t, denorm, epsilon)
        return jnp.sum(ll.reshape(crows // SUBLANES, SUBLANES, LANES), axis=0)

    def block_sum(nrows):
        acc = jnp.zeros((SUBLANES, LANES), jnp.float32)
        n_full = nrows // chunk_rows
        rem = nrows - n_full * chunk_rows
        if n_full == 1:
            acc = acc + chunk_ll_sum(0, chunk_rows)
        elif n_full > 1:
            def body(c, a):
                start = pl.multiple_of(c * chunk_rows, chunk_rows)
                return a + chunk_ll_sum(start, chunk_rows)
            acc = lax.fori_loop(0, n_full, body, acc,
                                unroll=4 if n_full >= 8 else True)
        if rem:
            acc = acc + chunk_ll_sum(n_full * chunk_rows, rem)
        return acc

    if last_rows == block_rows:
        # All blocks are full: single code path, no mask, no pl.when.
        out_ref[...] = block_sum(block_rows)
    else:
        i = pl.program_id(0)

        @pl.when(i < num_blocks - 1)
        def _():
            out_ref[...] = block_sum(block_rows)

        @pl.when(i == num_blocks - 1)
        def _():
            # Only the valid rows of the partial last block are ever read;
            # the OOB part of the pipelined buffer is never touched.
            out_ref[...] = block_sum(last_rows)


def poisson_ll_loss(pred_normalized, target_normalized,
                    normalization_method='linear', max_pixel=150.0,
                    epsilon=1e-9):
    """Negative Poisson log-likelihood loss (scalar), matching PoissonLLLoss."""
    assert pred_normalized.shape == target_normalized.shape
    denorm = _make_denorm(normalization_method, float(max_pixel))
    epsilon = float(epsilon)

    n_valid = int(pred_normalized.size)
    flat_p = pred_normalized.reshape(-1)
    flat_t = target_normalized.reshape(-1)

    # Main part: largest multiple of one (8,128) tile; tail (<1024 elems) is
    # handled in plain JAX below (no jnp.pad -> no extra HBM pass).
    n_main = (n_valid // (SUBLANES * LANES)) * (SUBLANES * LANES)
    rows = n_main // LANES  # multiple of 8

    if rows > 0:
        p2d = flat_p[:n_main].reshape(rows, LANES)
        t2d = flat_t[:n_main].reshape(rows, LANES)

        block_rows = min(MAX_BLOCK_ROWS, rows)
        # Keep >= ~4 grid steps on large inputs so ("parallel",) can shard
        # across both v7x TensorCores (no effect on single-TC v5e/v6e).
        if rows >= 4 * SUBLANES:
            quarter = (rows // 4) // SUBLANES * SUBLANES
            block_rows = min(block_rows, max(SUBLANES, quarter))
        # NOTE: bf16 inputs would additionally need block_rows % 16 == 0.
        num_blocks = pl.cdiv(rows, block_rows)
        last_rows = rows - (num_blocks - 1) * block_rows

        kernel = functools.partial(
            _poisson_ll_block_kernel,
            denorm=denorm,
            epsilon=epsilon,
            block_rows=block_rows,
            last_rows=last_rows,
            num_blocks=num_blocks,
            chunk_rows=CHUNK_ROWS,
        )

        partials = pl.pallas_call(
            kernel,
            out_shape=jax.ShapeDtypeStruct((num_blocks * SUBLANES, LANES),
                                           jnp.float32),
            grid_spec=pltpu.PrefetchScalarGridSpec(
                num_scalar_prefetch=0,
                grid=(num_blocks,),
                in_specs=[
                    pl.BlockSpec((block_rows, LANES), lambda i: (i, 0)),
                    pl.BlockSpec((block_rows, LANES), lambda i: (i, 0)),
                ],
                out_specs=pl.BlockSpec((SUBLANES, LANES), lambda i: (i, 0)),
            ),
            compiler_params=pltpu.CompilerParams(
                dimension_semantics=("parallel",),
                vmem_limit_bytes=VMEM_LIMIT_BYTES),
        )(p2d, t2d)

        main_sum = jnp.sum(partials, dtype=jnp.float32)
    else:
        main_sum = jnp.float32(0.0)

    tail = n_valid - n_main
    if tail:
        tail_ll = _log_likelihood(flat_p[n_main:].astype(jnp.float32),
                                  flat_t[n_main:].astype(jnp.float32),
                                  denorm, epsilon)
        tail_sum = jnp.sum(tail_ll, dtype=jnp.float32)
    else:
        tail_sum = jnp.float32(0.0)

    return -(main_sum + tail_sum) / jnp.float32(n_valid)


def _reference_loss(pred, targ, normalization_method='linear',
                    max_pixel=150.0, epsilon=1e-9):
    denorm = _make_denorm(normalization_method, float(max_pixel))
    ll = _log_likelihood(pred.astype(jnp.float32), targ.astype(jnp.float32),
                         denorm, float(epsilon))
    return -jnp.mean(ll)


if __name__ == "__main__":
    key = jax.random.PRNGKey(0)
    k1, k2, k3, k4 = jax.random.split(key, 4)

    # Small NCHW example (like the PyTorch module would receive).
    B, C, H, W = 2, 4, 16, 16
    pred = jax.random.uniform(k1, (B, C, H, W), dtype=jnp.float32,
                              minval=0.0, maxval=1.0)
    targ = jax.random.uniform(k2, (B, C, H, W), dtype=jnp.float32,
                              minval=0.0, maxval=1.0)

    loss = jax.block_until_ready(poisson_ll_loss(pred, targ,
                                                 normalization_method='linear'))
    ref = _reference_loss(pred, targ, normalization_method='linear')
    assert jnp.allclose(loss, ref, rtol=1e-4, atol=1e-4), (loss, ref)

    # Other normalization methods on the small shape.
    for method in ('log', 'anscombe'):
        l = jax.block_until_ready(
            poisson_ll_loss(pred, targ, normalization_method=method))
        r = _reference_loss(pred, targ, normalization_method=method)
        assert jnp.allclose(l, r, rtol=1e-4, atol=1e-4), (method, l, r)

    # Larger, ragged shape: exercises multi-block grid, partial last block,
    # and the plain-JAX ragged-tail path (360000 % 1024 != 0).
    pred2 = jax.random.uniform(k3, (4, 9, 100, 100), dtype=jnp.float32)
    targ2 = jax.random.uniform(k4, (4, 9, 100, 100), dtype=jnp.float32)
    loss2 = jax.block_until_ready(poisson_ll_loss(pred2, targ2))
    ref2 = _reference_loss(pred2, targ2)
    assert jnp.allclose(loss2, ref2, rtol=1e-4, atol=1e-4), (loss2, ref2)

    print("KERNEL_OK")
</pallas_src>

<mosaic_0001>
module attributes {stable_mosaic.version = 11 : i64} {
  func.func @_poisson_ll_block_kernel(%arg0: i32, %arg1: memref<16x128xf32, #tpu.memory_space<vmem>>, %arg2: memref<16x128xf32, #tpu.memory_space<vmem>>, %arg3: memref<8x128xf32, #tpu.memory_space<vmem>>) attributes {dimension_semantics = [#tpu.dimension_semantics<parallel>], iteration_bounds = array<i64: 1>, scalar_prefetch = 0 : i64, scratch_operands = 0 : i64, tpu.core_type = #tpu.core_type<tc>, window_params = [{transform_indices = @transform_0, window_bounds = array<i64: 16, 128>}, {transform_indices = @transform_1, window_bounds = array<i64: 16, 128>}, {transform_indices = @transform_2, window_bounds = array<i64: 8, 128>}]} {
    %cst = arith.constant 0.000000e+00 : f32
    %0 = vector.broadcast %cst : f32 to vector<8x128xf32>
    %c0 = arith.constant 0 : index
    %c0_0 = arith.constant 0 : index
    %1 = vector.load %arg1[%c0, %c0_0] : memref<16x128xf32, #tpu.memory_space<vmem>>, vector<16x128xf32>
    %c0_1 = arith.constant 0 : index
    %c0_2 = arith.constant 0 : index
    %2 = vector.load %arg2[%c0_1, %c0_2] : memref<16x128xf32, #tpu.memory_space<vmem>>, vector<16x128xf32>
    %cst_3 = arith.constant 1.500000e+02 : f32
    %3 = vector.broadcast %cst_3 : f32 to vector<16x128xf32>
    %4 = arith.mulf %1, %3 : vector<16x128xf32>
    %cst_4 = arith.constant 9.99999971E-10 : f32
    %5 = vector.broadcast %cst_4 : f32 to vector<16x128xf32>
    %6 = arith.maximumf %4, %5 : vector<16x128xf32>
    %cst_5 = arith.constant 1.500000e+02 : f32
    %7 = vector.broadcast %cst_5 : f32 to vector<16x128xf32>
    %8 = arith.mulf %2, %7 : vector<16x128xf32>
    %cst_6 = arith.constant 0.000000e+00 : f32
    %9 = vector.broadcast %cst_6 : f32 to vector<16x128xf32>
    %10 = arith.maximumf %8, %9 : vector<16x128xf32>
    %11 = math.log %6 : vector<16x128xf32>
    %12 = arith.mulf %10, %11 : vector<16x128xf32>
    %13 = arith.subf %12, %6 : vector<16x128xf32>
    %14 = vector.shape_cast %13 : vector<16x128xf32> to vector<2x8x128xf32>
    %cst_7 = arith.constant dense<0.000000e+00> : vector<8x128xf32>
    %15 = vector.multi_reduction <add>, %14, %cst_7 [0] : vector<2x8x128xf32> to vector<8x128xf32>
    %16 = arith.addf %0, %15 : vector<8x128xf32>
    %c0_8 = arith.constant 0 : index
    %c0_9 = arith.constant 0 : index
    %17 = vector.load %arg3[%c0_8, %c0_9] : memref<8x128xf32, #tpu.memory_space<vmem>>, vector<8x128xf32>
    tpu.vector_store %arg3[%c0_8, %c0_9], %16 {strides = array<i32>} : memref<8x128xf32, #tpu.memory_space<vmem>>, vector<8x128xf32>,
    return
  }
  func.func @transform_0(%arg0: i32) -> (i32, i32) {
    %c0_i32 = arith.constant 0 : i32
    %c0_i32_0 = arith.constant 0 : i32
    return %arg0, %c0_i32 : i32, i32
  }
  func.func @transform_1(%arg0: i32) -> (i32, i32) {
    %c0_i32 = arith.constant 0 : i32
    %c0_i32_0 = arith.constant 0 : i32
    return %arg0, %c0_i32 : i32, i32
  }
  func.func @transform_2(%arg0: i32) -> (i32, i32) {
    %c0_i32 = arith.constant 0 : i32
    %c0_i32_0 = arith.constant 0 : i32
    return %arg0, %c0_i32 : i32, i32
  }
}

</mosaic_0001>

<llo_original>
// kernel: tpu_custom_call.1
$region0: #{tpu_custom_call.1}
  #allocation0 [shape = 'u32[]', space=smem, size = 0x4, offset = 0x4, fixed_abs, tag = 'smem constant byte address 0x4 - core index']
  #allocation1 [shape = 'u32[144,128]{1,0:T(1,128)}', space=vmem, size = 0x12000, scoped, tag = 'internal scratch']
  %s0 = inlined_call_operand.hbm [shape: f32[16,128], index: 0, kind: input, shape index: {}]
  %s1 = inlined_call_operand.hbm [shape: f32[16,128], index: 1, kind: input, shape index: {}]
  %s2 = inlined_call_operand.hbm [shape: f32[8,128], index: 2, kind: output, shape index: {}]
  %s3 = sld [smem:[#allocation0]]
  $region26: #{tpu_custom_call.1} parent=0
    _
  %s5 = ssub.s32 1, %s3
  %s6 = scalar_select 0, %s5, %s3
  $region1: #{tpu_custom_call.1} parent=0
    #allocation2 [shape = 'u8[8192]{0}', space=vmem, size = 0x2000, scoped, tag = 'input window, operand 0, single buffered']
    #allocation3 [shape = 's32[1]{0}', space=sflag, size = 0x4, scoped, tag = 'scoped memory for tpu_custom_call.1']
    #allocation4 [shape = 's32[1]{0}', space=sflag, size = 0x4, scoped, tag = 'scoped memory for tpu_custom_call.1']
    #allocation5 [shape = 'u8[8192]{0}', space=vmem, size = 0x2000, scoped, tag = 'input window, operand 1, single buffered']
    #allocation6 [shape = 's32[1]{0}', space=sflag, size = 0x4, scoped, tag = 'scoped memory for tpu_custom_call.1']
    #allocation7 [shape = 'u8[4096]{0}', space=vmem, size = 0x1000, scoped, tag = 'output window, operand 0, single buffered']
    %7 = vsyncpa [#allocation3], 0
    %8 = vsyncpa [#allocation6], 0
    %9 = vsyncpa [#allocation4], 0
    // Predicated region
    $region2: #{tpu_custom_call.1} parent=1 // pred_check
      _
    $region3: #{tpu_custom_call.1} parent=1 // pred_check_branch
      %11 = sbr.rel (0) target = $region5
    $region4: #{tpu_custom_call.1} parent=1 // pred_region
      %s13 = ssub.s32 256, 256
      %14 = vsyncadd [#allocation3], %s13
      %s15 = sshll.u32 [#allocation2], 4
      %s16 = int_to_ptr.vmem [resolvable:$true] %s15
      %21 = dma.hbm_to_vmem [thread:$0]  %s0, 256, %s16, [#allocation3], 128, 128, 8
    $region5: #{tpu_custom_call.1} parent=1 // pred_fallthru
      _
    // Predicated region
    $region6: #{tpu_custom_call.1} parent=1 // pred_check
      _
    $region7: #{tpu_custom_call.1} parent=1 // pred_check_branch
      %23 = sbr.rel (0) target = $region9
    $region8: #{tpu_custom_call.1} parent=1 // pred_region
      %s25 = ssub.s32 256, 256
      %26 = vsyncadd [#allocation6], %s25
      %s27 = sshll.u32 [#allocation5], 4
      %s28 = int_to_ptr.vmem [resolvable:$true] %s27
      %33 = dma.hbm_to_vmem [thread:$0]  %s1, 256, %s28, [#allocation6], 128, 128, 8
    $region9: #{tpu_custom_call.1} parent=1 // pred_fallthru
      _
    // Predicated region
    $region10: #{tpu_custom_call.1} parent=1 // pred_check
      _
    $region11: #{tpu_custom_call.1} parent=1 // pred_check_branch
      %35 = sbr.rel (0) target = $region13
    $region12: #{tpu_custom_call.1} parent=1 // pred_region
      %36 = dma.done [#allocation3], 256
    $region13: #{tpu_custom_call.1} parent=1 // pred_fallthru
      _
    // Predicated region
    $region14: #{tpu_custom_call.1} parent=1 // pred_check
      _
    $region15: #{tpu_custom_call.1} parent=1 // pred_check_branch
      %38 = sbr.rel (0) target = $region17
    $region16: #{tpu_custom_call.1} parent=1 // pred_region
      %39 = dma.done [#allocation6], 256
    $region17: #{tpu_custom_call.1} parent=1 // pred_fallthru
      _
    %v40 = vld [vmem:[#allocation2] sm:$0xff]
    %v41 = vld [vmem:[#allocation2 + $0x8] sm:$0xff]
    %v42 = vld [vmem:[#allocation5] sm:$0xff]
    %v43 = vld [vmem:[#allocation5 + $0x8] sm:$0xff]
    %v44 = vmul.f32 %v40, 150.0
    %v45 = vmul.f32 %v41, 150.0
    %v46 = vmax.f32 %v44, 1e-09
    %v47 = vmax.f32 %v45, 1e-09
    %v48 = vmul.f32 %v42, 150.0
    %v49 = vmul.f32 %v43, 150.0
    %v50 = vmax.f32 %v48, 0.0
    %v51 = vmax.f32 %v49, 0.0
    %v52 = vlog2.pop %v46
    %v53 = vmul.f32 %v52, 0.6931472
    %v54 = vlog2.pop %v47
    %v55 = vmul.f32 %v54, 0.6931472
    %v56 = vmul.f32 %v50, %v53
    %v57 = vmul.f32 %v51, %v55
    %v58 = vsub.f32 %v56, %v46
    %v59 = vsub.f32 %v57, %v47
    %v60 = vadd.f32 %v58, %v59
    %v61 = vadd.f32 %v60, 0.0
    %62 = vst [vmem:[#allocation7] sm:$0xff] %v61
    // Predicated region
    $region18: #{tpu_custom_call.1} parent=1 // pred_check
      _
    $region19: #{tpu_custom_call.1} parent=1 // pred_check_branch
      %64 = sbr.rel (0) target = $region21
    $region20: #{tpu_custom_call.1} parent=1 // pred_region
      %s66 = ssub.s32 128, 128
      %67 = vsyncadd [#allocation4], %s66
      %s69 = sshll.u32 [#allocation7], 4
      %s70 = int_to_ptr.vmem [resolvable:$true] %s69
      %72 = dma.vmem_to_hbm [thread:$0]  %s70, 128, %s2, [#allocation4]
    $region21: #{tpu_custom_call.1} parent=1 // pred_fallthru
      _
    // Predicated region
    $region22: #{tpu_custom_call.1} parent=1 // pred_check
      _
    $region23: #{tpu_custom_call.1} parent=1 // pred_check_branch
      %74 = sbr.rel (0) target = $region25
    $region24: #{tpu_custom_call.1} parent=1 // pred_region
      %75 = dma.done [#allocation4], 128
    $region25: #{tpu_custom_call.1} parent=1 // pred_fallthru
      _
    %76 = vsyncpa [#allocation3], 1
    %77 = vsyncpa [#allocation6], 1
    %78 = vsyncpa [#allocation4], 1

</llo_original>
